<compile_context>
chip_gen: v7x
topology: tpu7x:2x2x1
jax: 0.10.0
libtpu: 0.0.40
codegen_flags: <defaults>
</compile_context>

<pallas_src>
import functools
import math

import jax
import jax.numpy as jnp
from jax.experimental import pallas as pl
from jax.experimental.pallas import tpu as pltpu


_VMEM_LIMIT = 48 * 1024 * 1024  # under v7x's 64 MiB physical VMEM per TensorCore


def _round_up(x, m):
    return ((x + m - 1) // m) * m


def _pick_tile(dim, prefs):
    """Largest preferred tile that evenly divides `dim`, else the full dim."""
    for p in prefs:
        if dim >= p and dim % p == 0:
            return p
    return dim


# ---------------------------------------------------------------------------
# Kernel 1: HF Conv1D == y = x @ W + b   (W shape (in, out)) — tiled matmul.
# ---------------------------------------------------------------------------
def _linear_fullk_kernel(x_ref, w_ref, b_ref, o_ref):
    # Full-K tile: single MXU pass, fp32 accumulation, bias added once.
    acc = jnp.dot(x_ref[...], w_ref[...], preferred_element_type=jnp.float32)
    o_ref[...] = (acc + b_ref[...].astype(jnp.float32)).astype(o_ref.dtype)


def _linear_tiledk_kernel(x_ref, w_ref, b_ref, o_ref, acc_ref):
    k = pl.program_id(2)

    @pl.when(k == 0)
    def _init():
        acc_ref[...] = jnp.zeros_like(acc_ref)

    acc_ref[...] += jnp.dot(x_ref[...], w_ref[...],
                            preferred_element_type=jnp.float32)

    @pl.when(k == pl.num_programs(2) - 1)
    def _finalize():
        # Bias added exactly once (not per K step).
        o_ref[...] = (acc_ref[...] + b_ref[...].astype(jnp.float32)).astype(o_ref.dtype)


def conv1d_linear(x2d, w, b, out_dtype=None):
    """x2d: (M, K), w: (K, N), b: (N,) -> (M, N)  (HF Conv1D semantics)."""
    M, K = x2d.shape
    N = w.shape[1]
    out_dtype = out_dtype if out_dtype is not None else x2d.dtype

    # Pad M so tiles never fall back to the (possibly huge / unaligned) full M.
    if M >= 128:
        Mp = _round_up(M, 128)
        tm = _pick_tile(Mp, (512, 256, 128))
    else:
        Mp = _round_up(M, 8)
        tm = Mp
    if Mp != M:
        x2d = jnp.pad(x2d, ((0, Mp - M), (0, 0)))

    tn = _pick_tile(N, (512, 256, 128))
    b2 = b.reshape(1, N).astype(jnp.float32)

    if K <= 2048:
        # Full-K tile: no reduction grid axis, no accumulator scratch RMW.
        out = pl.pallas_call(
            _linear_fullk_kernel,
            out_shape=jax.ShapeDtypeStruct((Mp, N), out_dtype),
            grid=(Mp // tm, N // tn),
            in_specs=[
                pl.BlockSpec((tm, K), lambda i, j: (i, 0)),
                pl.BlockSpec((K, tn), lambda i, j: (0, j)),
                pl.BlockSpec((1, tn), lambda i, j: (0, j)),
            ],
            out_specs=pl.BlockSpec((tm, tn), lambda i, j: (i, j)),
            compiler_params=pltpu.CompilerParams(
                dimension_semantics=("parallel", "parallel"),
                vmem_limit_bytes=_VMEM_LIMIT),
        )(x2d, w, b2)
    else:
        tk = _pick_tile(K, (512, 256, 128))
        out = pl.pallas_call(
            _linear_tiledk_kernel,
            out_shape=jax.ShapeDtypeStruct((Mp, N), out_dtype),
            grid=(Mp // tm, N // tn, K // tk),
            in_specs=[
                pl.BlockSpec((tm, tk), lambda i, j, k: (i, k)),
                pl.BlockSpec((tk, tn), lambda i, j, k: (k, j)),
                pl.BlockSpec((1, tn), lambda i, j, k: (0, j)),
            ],
            out_specs=pl.BlockSpec((tm, tn), lambda i, j, k: (i, j)),
            scratch_shapes=[pltpu.VMEM((tm, tn), jnp.float32)],
            compiler_params=pltpu.CompilerParams(
                dimension_semantics=("parallel", "parallel", "arbitrary"),
                vmem_limit_bytes=_VMEM_LIMIT),
        )(x2d, w, b2)

    return out[:M] if Mp != M else out


# ---------------------------------------------------------------------------
# Kernel 2: causal self-attention, query-tiled; all heads of one batch per step.
# ---------------------------------------------------------------------------
def _attn_kernel(q_ref, k_ref, v_ref, o_ref, *, num_heads, head_dim):
    # q_ref: (tq, D)   k_ref/v_ref: (T, D)   o_ref: (tq, D)
    tq = q_ref.shape[0]
    T = k_ref.shape[0]
    q_start = pl.program_id(1) * tq

    # Per-query-tile causal mask: (tq, T) only (not (T, T)).
    row = q_start + jax.lax.broadcasted_iota(jnp.int32, (tq, T), 0)
    col = jax.lax.broadcasted_iota(jnp.int32, (tq, T), 1)
    causal = col <= row
    mask_value = jnp.finfo(jnp.float32).min

    # Heads in pairs: 2*head_dim-lane loads/stores (128 lanes at head_dim=64),
    # per-head split done in-register.  1/sqrt(head_dim) is pre-folded into
    # the q-columns of c_attn's weights (prepare_params), so q is used as-is.
    pair = 2 if num_heads % 2 == 0 else 1
    pw = pair * head_dim

    for hp in range(0, num_heads, pair):  # static unroll
        lo = hp * head_dim
        qp = q_ref[:, lo:lo + pw]
        kp = k_ref[:, lo:lo + pw]
        vp = v_ref[:, lo:lo + pw]

        outs = []
        for h in range(pair):
            a = h * head_dim
            q = qp[:, a:a + head_dim]
            k = kp[:, a:a + head_dim]
            v = vp[:, a:a + head_dim]

            # q @ k^T without materializing a transpose (contract last axes);
            # fp32 scores regardless of operand dtype.
            s = jax.lax.dot_general(q, k, (((1,), (1,)), ((), ())),
                                    preferred_element_type=jnp.float32)
            s = jnp.where(causal, s, mask_value)

            # softmax along keys in fp32 (safe on v5e: no bf16 VPU/EUP);
            # divide via EUP reciprocal (free slot).
            m = jnp.max(s, axis=-1, keepdims=True)
            e = jnp.exp(s - m)
            p = e * pl.reciprocal(jnp.sum(e, axis=-1, keepdims=True), approx=True)

            outs.append(jnp.dot(p.astype(v.dtype), v,
                                preferred_element_type=jnp.float32))

        # Lane-dense per-pair store (128 lanes at GPT-2 head_dim=64); no
        # whole-output concatenate, no H simultaneous live head outputs.
        block = outs[0] if pair == 1 else jnp.concatenate(outs, axis=-1)
        o_ref[:, lo:lo + pw] = block.astype(o_ref.dtype)


# ---------------------------------------------------------------------------
# Parameter prep: fold the attention scale into c_attn's q-columns (one time).
# ---------------------------------------------------------------------------
def prepare_params(raw_params, num_heads):
    w = raw_params["c_attn_w"]
    b = raw_params["c_attn_b"]
    D = raw_params["c_proj_w"].shape[0]
    hd = D // num_heads
    scale = 1.0 / math.sqrt(hd)
    col_scale = jnp.concatenate([
        jnp.full((D,), scale, dtype=w.dtype),
        jnp.ones((2 * D,), dtype=w.dtype),
    ])
    return {
        "c_attn_w": w * col_scale[None, :],
        "c_attn_b": b * col_scale,
        "c_proj_w": raw_params["c_proj_w"],
        "c_proj_b": raw_params["c_proj_b"],
    }


# ---------------------------------------------------------------------------
# Forward wrapper (no split_heads / merge_heads transposes on the hot path).
# ---------------------------------------------------------------------------
def gpt2_attention_forward(hidden_states, params, num_heads, use_cache=False,
                           compute_dtype=None):
    B, T, D = hidden_states.shape
    hd = D // num_heads
    in_dtype = hidden_states.dtype
    compute_dtype = jnp.dtype(compute_dtype) if compute_dtype is not None else in_dtype

    # --- c_attn: fused qkv projection -------------------------------------
    x2d = hidden_states.reshape(B * T, D).astype(compute_dtype)
    qkv = conv1d_linear(x2d,
                        params["c_attn_w"].astype(compute_dtype),
                        params["c_attn_b"].astype(jnp.float32),
                        out_dtype=compute_dtype)
    qkv3 = qkv.reshape(B, T, 3 * D)

    # --- causal self-attention (query-tiled) -------------------------------
    tq = _pick_tile(T, (128, 256))
    n_qt = T // tq

    kernel = functools.partial(_attn_kernel, num_heads=num_heads, head_dim=hd)

    q_spec = pl.BlockSpec((None, tq, D), lambda b, i: (b, i, 0))
    out_spec = pl.BlockSpec((None, tq, D), lambda b, i: (b, i, 0))

    if D % 128 == 0:
        # Zero-copy q/k/v: the same fused qkv buffer is passed three times;
        # the feature axis is blocked in units of D, so block index 0/1/2
        # selects the q / k / v columns directly out of [B, T, 3D].
        kv_specs = [pl.BlockSpec((None, T, D), lambda b, i: (b, 0, 1)),
                    pl.BlockSpec((None, T, D), lambda b, i: (b, 0, 2))]
        attn_args = (qkv3, qkv3, qkv3)
    else:
        # Small / lane-unaligned D: wrapper-side slices so every block's last
        # dim equals the full array dim ((8,128) block-shape rule).
        kv_specs = [pl.BlockSpec((None, T, D), lambda b, i: (b, 0, 0)),
                    pl.BlockSpec((None, T, D), lambda b, i: (b, 0, 0))]
        attn_args = (qkv3[:, :, :D], qkv3[:, :, D:2 * D], qkv3[:, :, 2 * D:])

    attn_out = pl.pallas_call(
        kernel,
        out_shape=jax.ShapeDtypeStruct((B, T, D), compute_dtype),
        grid=(B, n_qt),
        in_specs=[q_spec] + kv_specs,
        out_specs=out_spec,
        compiler_params=pltpu.CompilerParams(
            dimension_semantics=("parallel", "parallel"),
            vmem_limit_bytes=_VMEM_LIMIT),
    )(*attn_args)

    # --- c_proj ------------------------------------------------------------
    out = conv1d_linear(attn_out.reshape(B * T, D),
                        params["c_proj_w"].astype(compute_dtype),
                        params["c_proj_b"].astype(jnp.float32),
                        out_dtype=in_dtype).reshape(B, T, D)

    present = None
    if use_cache:
        # Only materialize the split-head K/V cache when actually requested.
        k = qkv3[:, :, D:2 * D].reshape(B, T, num_heads, hd).transpose(0, 2, 1, 3)
        v = qkv3[:, :, 2 * D:].reshape(B, T, num_heads, hd).transpose(0, 2, 1, 3)
        present = (k.astype(in_dtype), v.astype(in_dtype))

    # attn_dropout / resid_dropout are Identity at inference (eval mode).
    # TODO(synk): cross-attention (q_attn/encoder path), layer_past concat,
    # attention_mask / head_mask and output_attentions are not implemented.
    return out, present


# ---------------------------------------------------------------------------
# Pure-JAX reference (for a self-consistency check); takes RAW (unscaled) params.
# ---------------------------------------------------------------------------
def reference_forward(x, raw_params, num_heads):
    B, T, D = x.shape
    hd = D // num_heads
    qkv = x.reshape(B * T, D) @ raw_params["c_attn_w"] + raw_params["c_attn_b"]
    q, k, v = jnp.split(qkv.reshape(B, T, 3 * D), 3, axis=-1)
    sh = lambda t: t.reshape(B, T, num_heads, hd).transpose(0, 2, 1, 3)
    q, k, v = sh(q), sh(k), sh(v)
    s = jnp.einsum("bhqd,bhkd->bhqk", q, k) / (hd ** 0.5)
    mask = jnp.tril(jnp.ones((T, T), dtype=bool))
    s = jnp.where(mask[None, None], s, jnp.finfo(s.dtype).min)
    p = jax.nn.softmax(s, axis=-1)
    o = jnp.einsum("bhqk,bhkd->bhqd", p, v)
    o = o.transpose(0, 2, 1, 3).reshape(B * T, D)
    return (o @ raw_params["c_proj_w"] + raw_params["c_proj_b"]).reshape(B, T, D)


if __name__ == "__main__":
    def run_case(B, T, D, H, compute_dtype, atol, rtol, seed=0):
        key = jax.random.PRNGKey(seed)
        k_x, k_wa, k_ba, k_wp, k_bp = jax.random.split(key, 5)
        x = jax.random.normal(k_x, (B, T, D), dtype=jnp.float32)
        raw = {
            "c_attn_w": 0.02 * jax.random.normal(k_wa, (D, 3 * D), dtype=jnp.float32),
            "c_attn_b": 0.02 * jax.random.normal(k_ba, (3 * D,), dtype=jnp.float32),
            "c_proj_w": 0.02 * jax.random.normal(k_wp, (D, D), dtype=jnp.float32),
            "c_proj_b": 0.02 * jax.random.normal(k_bp, (D,), dtype=jnp.float32),
        }
        params = prepare_params(raw, H)
        out, _ = gpt2_attention_forward(x, params, H, use_cache=False,
                                        compute_dtype=compute_dtype)
        out = jax.block_until_ready(out)
        ref = reference_forward(x, raw, H)
        assert out.shape == ref.shape
        assert bool(jnp.all(jnp.isfinite(out))), "non-finite output"
        err = float(jnp.max(jnp.abs(out - ref)))
        assert jnp.allclose(out, ref, atol=atol, rtol=rtol), (
            f"mismatch B={B} T={T} D={D} H={H} dtype={compute_dtype}: max abs err {err}")

    # 1) Small config implied by the module: hidden=32, heads=4 (head_dim=8),
    #    seq=8, batch=2 — fp32, unaligned-D fallback path.
    run_case(2, 8, 32, 4, jnp.float32, atol=2e-3, rtol=2e-3)
    # 2) 128-aligned config: exercises the zero-copy blocked-qkv path, the
    #    128-lane head-pair stores and multi-query-tile causal masking (fp32).
    run_case(2, 256, 128, 2, jnp.float32, atol=2e-3, rtol=2e-3)
    # 3) bf16 MXU operands with fp32 softmax / accumulation (v6e/v7x fast path).
    run_case(2, 8, 32, 4, jnp.bfloat16, atol=2e-2, rtol=2e-2)

    print("KERNEL_OK")
</pallas_src>

<mosaic_0001>
module attributes {stable_mosaic.version = 11 : i64} {
  func.func @_linear_fullk_kernel(%arg0: i32, %arg1: i32, %arg2: memref<16x32xf32, #tpu.memory_space<vmem>>, %arg3: memref<32x96xf32, #tpu.memory_space<vmem>>, %arg4: memref<1x96xf32, #tpu.memory_space<vmem>>, %arg5: memref<16x96xf32, #tpu.memory_space<vmem>>) attributes {dimension_semantics = [#tpu.dimension_semantics<parallel>, #tpu.dimension_semantics<parallel>], iteration_bounds = array<i64: 1, 1>, scalar_prefetch = 0 : i64, scratch_operands = 0 : i64, tpu.core_type = #tpu.core_type<tc>, window_params = [{transform_indices = @transform_0, window_bounds = array<i64: 16, 32>}, {transform_indices = @transform_1, window_bounds = array<i64: 32, 96>}, {transform_indices = @transform_2, window_bounds = array<i64: 1, 96>}, {transform_indices = @transform_3, window_bounds = array<i64: 16, 96>}]} {
    %c0 = arith.constant 0 : index
    %c0_0 = arith.constant 0 : index
    %0 = vector.load %arg2[%c0, %c0_0] : memref<16x32xf32, #tpu.memory_space<vmem>>, vector<16x32xf32>
    %c0_1 = arith.constant 0 : index
    %c0_2 = arith.constant 0 : index
    %1 = vector.load %arg3[%c0_1, %c0_2] : memref<32x96xf32, #tpu.memory_space<vmem>>, vector<32x96xf32>
    %cst = arith.constant dense<0.000000e+00> : vector<16x96xf32>
    %2 = tpu.matmul %0, %1, %cst {dimension_numbers = #tpu.dot_dimension_numbers<[1], [0], [0], [1], [0, 0, 1, 1], [], []>} : vector<16x32xf32>, vector<32x96xf32>, vector<16x96xf32> -> vector<16x96xf32>
    %c0_3 = arith.constant 0 : index
    %c0_4 = arith.constant 0 : index
    %3 = vector.load %arg4[%c0_3, %c0_4] : memref<1x96xf32, #tpu.memory_space<vmem>>, vector<1x96xf32>
    %4 = vector.broadcast %3 : vector<1x96xf32> to vector<16x96xf32>
    %5 = arith.addf %2, %4 : vector<16x96xf32>
    %c0_5 = arith.constant 0 : index
    %c0_6 = arith.constant 0 : index
    %6 = vector.load %arg5[%c0_5, %c0_6] : memref<16x96xf32, #tpu.memory_space<vmem>>, vector<16x96xf32>
    tpu.vector_store %arg5[%c0_5, %c0_6], %5 {strides = array<i32>} : memref<16x96xf32, #tpu.memory_space<vmem>>, vector<16x96xf32>,
    return
  }
  func.func @transform_0(%arg0: i32, %arg1: i32) -> (i32, i32) {
    %c0_i32 = arith.constant 0 : i32
    %c0_i32_0 = arith.constant 0 : i32
    return %arg0, %c0_i32 : i32, i32
  }
  func.func @transform_1(%arg0: i32, %arg1: i32) -> (i32, i32) {
    %c0_i32 = arith.constant 0 : i32
    %c0_i32_0 = arith.constant 0 : i32
    return %c0_i32, %arg1 : i32, i32
  }
  func.func @transform_2(%arg0: i32, %arg1: i32) -> (i32, i32) {
    %c0_i32 = arith.constant 0 : i32
    %c0_i32_0 = arith.constant 0 : i32
    return %c0_i32, %arg1 : i32, i32
  }
  func.func @transform_3(%arg0: i32, %arg1: i32) -> (i32, i32) {
    %c0_i32 = arith.constant 0 : i32
    return %arg0, %arg1 : i32, i32
  }
}

</mosaic_0001>

<llo_original>
// kernel: tpu_custom_call.1
$region0: #{tpu_custom_call.1}
  #allocation0 [shape = 'u32[]', space=smem, size = 0x4, offset = 0x4, fixed_abs, tag = 'smem constant byte address 0x4 - core index']
  #allocation1 [shape = 'u32[144,128]{1,0:T(1,128)}', space=vmem, size = 0x12000, scoped, tag = 'internal scratch']
  %s0 = inlined_call_operand.hbm [shape: f32[16,32], index: 0, kind: input, shape index: {}]
  %s1 = inlined_call_operand.hbm [shape: f32[32,96], index: 1, kind: input, shape index: {}]
  %s2 = inlined_call_operand.vmem [shape: f32[1,96], index: 2, kind: input, shape index: {}]
  %s3 = inlined_call_operand.hbm [shape: f32[16,96], index: 3, kind: output, shape index: {}]
  %s4 = sld [smem:[#allocation0]]
  $region30: #{tpu_custom_call.1} parent=0
    _
  %s6 = ssub.s32 1, %s4
  %s7 = scalar_select 0, %s6, %s4
  $region1: #{tpu_custom_call.1} parent=0
    #allocation2 [shape = 'u8[8192]{0}', space=vmem, size = 0x2000, scoped, tag = 'input window, operand 0, single buffered']
    #allocation3 [shape = 's32[1]{0}', space=sflag, size = 0x4, scoped, tag = 'scoped memory for tpu_custom_call.1']
    #allocation4 [shape = 's32[1]{0}', space=sflag, size = 0x4, scoped, tag = 'scoped memory for tpu_custom_call.1']
    #allocation5 [shape = 'u8[16384]{0}', space=vmem, size = 0x4000, scoped, tag = 'input window, operand 1, single buffered']
    #allocation6 [shape = 's32[1]{0}', space=sflag, size = 0x4, scoped, tag = 'scoped memory for tpu_custom_call.1']
    #allocation7 [shape = 'u8[8192]{0}', space=vmem, size = 0x2000, scoped, tag = 'output window, operand 0, single buffered']
    %8 = vsyncpa [#allocation3], 0
    %9 = vsyncpa [#allocation6], 0
    %10 = vsyncpa [#allocation4], 0
    // Predicated region
    $region2: #{tpu_custom_call.1} parent=1 // pred_check
      _
    $region3: #{tpu_custom_call.1} parent=1 // pred_check_branch
      %12 = sbr.rel (0) target = $region5
    $region4: #{tpu_custom_call.1} parent=1 // pred_region
      %s14 = ssub.s32 256, 256
      %15 = vsyncadd [#allocation3], %s14
      %s16 = sshll.u32 [#allocation2], 4
      %s17 = int_to_ptr.vmem [resolvable:$true] %s16
      %22 = dma.hbm_to_vmem [thread:$0]  %s0, 256, %s17, [#allocation3], 128, 128, 8
    $region5: #{tpu_custom_call.1} parent=1 // pred_fallthru
      _
    // Predicated region
    $region6: #{tpu_custom_call.1} parent=1 // pred_check
      _
    $region7: #{tpu_custom_call.1} parent=1 // pred_check_branch
      %24 = sbr.rel (0) target = $region9
    $region8: #{tpu_custom_call.1} parent=1 // pred_region
      %s26 = ssub.s32 512, 512
      %27 = vsyncadd [#allocation6], %s26
      %s28 = sshll.u32 [#allocation5], 4
      %s29 = int_to_ptr.vmem [resolvable:$true] %s28
      %34 = dma.hbm_to_vmem [thread:$0]  %s1, 512, %s29, [#allocation6], 128, 128, 8
    $region9: #{tpu_custom_call.1} parent=1 // pred_fallthru
      _
    // Predicated region
    $region10: #{tpu_custom_call.1} parent=1 // pred_check
      _
    $region11: #{tpu_custom_call.1} parent=1 // pred_check_branch
      %36 = sbr.rel (0) target = $region13
    $region12: #{tpu_custom_call.1} parent=1 // pred_region
      _
    $region13: #{tpu_custom_call.1} parent=1 // pred_fallthru
      _
    // Predicated region
    $region14: #{tpu_custom_call.1} parent=1 // pred_check
      _
    $region15: #{tpu_custom_call.1} parent=1 // pred_check_branch
      %38 = sbr.rel (0) target = $region17
    $region16: #{tpu_custom_call.1} parent=1 // pred_region
      %39 = dma.done [#allocation3], 256
    $region17: #{tpu_custom_call.1} parent=1 // pred_fallthru
      _
    // Predicated region
    $region18: #{tpu_custom_call.1} parent=1 // pred_check
      _
    $region19: #{tpu_custom_call.1} parent=1 // pred_check_branch
      %41 = sbr.rel (0) target = $region21
    $region20: #{tpu_custom_call.1} parent=1 // pred_region
      %42 = dma.done [#allocation6], 512
    $region21: #{tpu_custom_call.1} parent=1 // pred_fallthru
      _
    %v43 = vld [vmem:[#allocation2] sm:$0xff]
    %v44 = vld [vmem:[#allocation2 + $0x8] sm:$0xff]
    %v45 = vld [vmem:[#allocation5] sm:$0xff]
    %v46 = vld [vmem:[#allocation5 + $0x8] sm:$0xff]
    %v47 = vld [vmem:[#allocation5 + $0x10] sm:$0xff]
    %v48 = vld [vmem:[#allocation5 + $0x18] sm:$0xff]
    %v49 = vld [vmem:[%s2] sm:$0x1]
    %v51 = vlaneseq
    %v52 = vshrl.u32 %v51, 7
    %v53 = vsub.s32 0, %v52
    %v54 = vrot.slane %v49, %v53
    %vm56 = vcmask 261120
    %v58 = vsel %vm56, %v43, 0
    %v61 = vsel %vm56, %v44, 0
    %63 = vmatprep.subr.mxu0 0.0
    %64 = vmatpush1.msra.mxu0 %v45
    %65 = vmatprep.subr.mxu0 0.0
    %66 = vmatpush1.msra.mxu0 %v46
    %67 = vmatprep.subr.mxu0 0.0
    %68 = vmatpush1.msra.mxu0 %v47
    %69 = vmatprep.subr.mxu0 0.0
    %70 = vmatpush1.msra.mxu0 %v48
    %71 = vmatprep.subr.mxu0 0.0
    %72 = vmatpush1.msra.mxu0 0.0
    %73 = vmatprep.subr.mxu0 0.0
    %74 = vmatpush1.msra.mxu0 0.0
    %75 = vmatprep.subr.mxu0 0.0
    %76 = vmatpush1.msra.mxu0 0.0
    %77 = vmatprep.subr.mxu0 0.0
    %78 = vmatpush1.msra.mxu0 0.0
    %79 = vmatprep.subr.mxu0 0.0
    %80 = vmatpush1.msra.mxu0 0.0
    %81 = vmatprep.subr.mxu0 0.0
    %82 = vmatpush1.msra.mxu0 0.0
    %83 = vmatprep.subr.mxu0 0.0
    %84 = vmatpush1.msra.mxu0 0.0
    %85 = vmatprep.subr.mxu0 0.0
    %86 = vmatpush1.msra.mxu0 0.0
    %87 = vmatprep.subr.mxu0 0.0
    %88 = vmatpush1.msra.mxu0 0.0
    %89 = vmatprep.subr.mxu0 0.0
    %90 = vmatpush1.msra.mxu0 0.0
    %91 = vmatprep.subr.mxu0 0.0
    %92 = vmatpush1.msra.mxu0 0.0
    %93 = vmatprep.subr.mxu0 0.0
    %94 = vmatpush1.msra.mxu0 0.0
    %95 = vmatprep.subr.mxu0 0.0
    %96 = vmatpush1.msra.mxu0 0.0
    %97 = vmatprep.subr.mxu0 0.0
    %98 = vmatpush1.msra.mxu0 0.0
    %99 = vmatprep.subr.mxu0 0.0
    %100 = vmatpush1.msra.mxu0 0.0
    %101 = vmatprep.subr.mxu0 0.0
    %102 = vmatpush1.msra.mxu0 0.0
    %103 = vmatprep.subr.mxu0 0.0
    %104 = vmatpush1.msra.mxu0 0.0
    %105 = vmatprep.subr.mxu0 0.0
    %106 = vmatpush1.msra.mxu0 0.0
    %107 = vmatprep.subr.mxu0 0.0
    %108 = vmatpush1.msra.mxu0 0.0
    %109 = vmatprep.subr.mxu0 0.0
    %110 = vmatpush1.msra.mxu0 0.0
    %111 = vmatprep.subr.mxu0 0.0
    %112 = vmatpush1.msra.mxu0 0.0
    %113 = vmatprep.subr.mxu0 0.0
    %114 = vmatpush1.msra.mxu0 0.0
    %115 = vmatprep.subr.mxu0 0.0
    %116 = vmatpush1.msra.mxu0 0.0
    %117 = vmatprep.subr.mxu0 0.0
    %118 = vmatpush1.msra.mxu0 0.0
    %119 = vmatprep.subr.mxu0 0.0
    %120 = vmatpush1.msra.mxu0 0.0
    %121 = vmatprep.subr.mxu0 0.0
    %122 = vmatpush1.msra.mxu0 0.0
    %123 = vmatprep.subr.mxu0 0.0
    %124 = vmatpush1.msra.mxu0 0.0
    %125 = vmatprep.subr.mxu0 0.0
    %126 = vmatpush1.msra.mxu0 0.0
    %127 = vmatprep.mubr.f32.mxu0 0.0
    %128 = vmatmul.mubr.f32.gmra.mrb[0].mxu0 %v58
    %v129 = vpop.f32.mrb[0].mxu0
    %v130 = vadd.f32 %v54, %v129
    %v131 = vpop.f32.mrb[0].mxu0
    %132 = vmatprep.mubr.f32.mxu0 0.0
    %133 = vmatmul.mubr.f32.gmra.mrb[0].mxu0 %v61
    %v134 = vpop.f32.mrb[0].mxu0
    %v135 = vadd.f32 %v54, %v134
    %v136 = vpop.f32.mrb[0].mxu0
    %137 = vdwg.mxu0
    %vm138 = vcmask 785408
    %139 = vst.msk [vmem:[#allocation7] sm:$0xff] %vm138, %v130
    %140 = vst.msk [vmem:[#allocation7 + $0x8] sm:$0xff] %vm138, %v135
    // Predicated region
    $region22: #{tpu_custom_call.1} parent=1 // pred_check
      _
    $region23: #{tpu_custom_call.1} parent=1 // pred_check_branch
      %142 = sbr.rel (0) target = $region25
    $region24: #{tpu_custom_call.1} parent=1 // pred_region
      %s144 = ssub.s32 256, 256
      %145 = vsyncadd [#allocation4], %s144
      %s146 = sshll.u32 [#allocation7], 4
      %s147 = int_to_ptr.vmem [resolvable:$true] %s146
      %152 = dma.vmem_to_hbm [thread:$0]  %s147, 256, %s3, [#allocation4], 128, 128, 8
    $region25: #{tpu_custom_call.1} parent=1 // pred_fallthru
      _
    // Predicated region
    $region26: #{tpu_custom_call.1} parent=1 // pred_check
      _
    $region27: #{tpu_custom_call.1} parent=1 // pred_check_branch
      %154 = sbr.rel (0) target = $region29
    $region28: #{tpu_custom_call.1} parent=1 // pred_region
      %155 = dma.done [#allocation4], 256
    $region29: #{tpu_custom_call.1} parent=1 // pred_fallthru
      _
    %156 = vsyncpa [#allocation3], 1
    %157 = vsyncpa [#allocation6], 1
    %158 = vsyncpa [#allocation4], 1

</llo_original>
